<compile_context>
chip_gen: v5e
topology: v5e:2x2
jax: 0.10.0
libtpu: 0.0.40
codegen_flags: <defaults>
</compile_context>

<pallas_src>
import math

import jax
import jax.numpy as jnp
from jax.experimental import pallas as pl
from jax.experimental.pallas import tpu as pltpu


# ---------------------------------------------------------------------------
# Kernels
# ---------------------------------------------------------------------------

def _value_kernel(x_ref, w_ref, b_ref, o_ref):
    # x_ref: [tile_m, K], w_ref: [K, tile_n], b_ref: [1, tile_n] (f32).
    acc = jnp.dot(x_ref[...], w_ref[...], preferred_element_type=jnp.float32)
    o_ref[...] = (acc + b_ref[...]).astype(o_ref.dtype)


def _value_kernel_ktiled(x_ref, w_ref, b_ref, o_ref, acc_ref):
    # K-tiled variant: f32 VMEM accumulator, init/finalize via pl.when.
    k = pl.program_id(2)

    @pl.when(k == 0)
    def _():
        acc_ref[...] = jnp.zeros_like(acc_ref)

    acc_ref[...] += jnp.dot(x_ref[...], w_ref[...],
                            preferred_element_type=jnp.float32)

    @pl.when(k == pl.num_programs(2) - 1)
    def _():
        o_ref[...] = (acc_ref[...] + b_ref[...]).astype(o_ref.dtype)


# ---------------------------------------------------------------------------
# Tile / VMEM heuristics
# ---------------------------------------------------------------------------

def _round_up(x, m):
    return (x + m - 1) // m * m


def _round_down(x, m):
    return max(m, x // m * m)


def _device_kind():
    try:
        return jax.devices()[0].device_kind.lower()
    except Exception:
        return ""


def _is_newer_gen(kind):
    return any(t in kind for t in ("v6", "v7", "7x"))


def _vmem_limit_bytes():
    """Generation-aware scoped-VMEM limit (~60% of physical, capped at 64 MiB)."""
    cap = None
    try:
        cap = getattr(pltpu.get_tpu_info(), "vmem_capacity_bytes", None)
    except Exception:
        cap = None
    if cap:
        return int(min(cap * 0.6, 64 * 1024 * 1024))
    kind = _device_kind()
    if ("v7" in kind) or ("7x" in kind):
        return 40 * 1024 * 1024        # v7x: 64 MiB physical per TensorCore
    return 64 * 1024 * 1024            # v5e / v6e: 128 MiB physical


def _largest_aligned_divisor(n, cap):
    """Largest multiple of 128 dividing n that is <= cap (None if none)."""
    best, d = None, 128
    while d <= min(n, cap):
        if n % d == 0:
            best = d
        d += 128
    return best


def _footprint_bytes(tile_m, tile_n, tile_k, d_out, x_it, w_it, out_it):
    # Worst case: every pipelined operand double-buffered + f32 acc scratch.
    return (2 * tile_m * tile_k * x_it        # x tiles
            + 2 * tile_k * tile_n * w_it      # W tiles
            + 2 * d_out * 4                   # f32 bias tiles (upper bound)
            + 2 * tile_m * tile_n * out_it    # output tiles
            + tile_m * tile_n * 4)            # f32 accumulator scratch


def _select_tiles(M, d_model, d_out, x_it, w_it, out_it, budget,
                  tile_m=None, tile_n=None, tile_k=None):
    kind = _device_kind()
    newer = _is_newer_gen(kind)
    mxu = 256 if newer else 128          # MXU-aligned M-tile multiple
    max_tm = 1024 if newer else 512

    auto_m, auto_n, auto_k = tile_m is None, tile_n is None, tile_k is None

    if auto_n:
        cands = [t for t in (512, 256, 128) if d_out % t == 0]
        tile_n = cands[0] if cands else d_out
    if auto_m:
        if M >= mxu:
            tile_m = min(max_tm, _round_up(M, mxu))
        else:
            tile_m = _round_up(M, 8)
    if auto_k:
        tile_k = d_model

    def fits(tm, tn, tk):
        return _footprint_bytes(tm, tn, tk, d_out, x_it, w_it, out_it) <= budget

    # Shrink auto-selected dims (MXU-aligned) until the tiles fit the budget;
    # K-tile only as a late resort so the MXU keeps full-size M/N tiles.
    while not fits(tile_m, tile_n, tile_k):
        if auto_m and tile_m > mxu:
            tile_m = _round_down(tile_m // 2, mxu)
        elif (auto_n and tile_n > 128 and tile_n % 256 == 0
              and d_out % (tile_n // 2) == 0):
            tile_n //= 2
        elif auto_k and _largest_aligned_divisor(d_model, tile_k // 2):
            tile_k = _largest_aligned_divisor(d_model, tile_k // 2)
        elif auto_m and tile_m > 8:
            tile_m = _round_down(tile_m // 2, 8)
        else:
            break
    return tile_m, tile_n, tile_k


# ---------------------------------------------------------------------------
# Public wrapper
# ---------------------------------------------------------------------------

def value_layer(x, w, b, *, tile_m=None, tile_n=None, tile_k=None,
                compute_dtype=jnp.bfloat16, out_dtype=None):
    """ValueLayer forward (nn.Linear(d_model, d_out)):  y = x @ w + b.

    x: [B, S, d_model]; w: [d_model, d_out] (transposed vs PyTorch); b: [d_out]
    -> [B, S, d_out].

    compute_dtype: dtype fed to the MXU.  Default bf16 (3-8x MXU throughput on
      v5e/v6e/v7x — f32 matmuls decompose into multiple passes); accumulation
      is always f32 and the bias add is f32.  Pass compute_dtype=jnp.float32
      (or None to keep x.dtype) for strict PyTorch-f32 numerics.
    out_dtype: output dtype (default x.dtype; bf16 halves writeback bytes).
    """
    B, S, d_model = x.shape
    assert w.shape[0] == d_model and b.shape == (w.shape[1],)
    d_out = w.shape[1]
    M = B * S

    out_dtype = x.dtype if out_dtype is None else out_dtype
    cdt = x.dtype if compute_dtype is None else compute_dtype

    # No jnp.pad of x / no out[:M] slice: Pallas clips partial edge blocks,
    # avoiding an extra HBM read+write pass over x and the output.
    x2d = x.reshape(M, d_model).astype(cdt)
    w2d = w.astype(cdt)
    b2d = b.reshape(1, d_out).astype(jnp.float32)

    x_it = jnp.dtype(cdt).itemsize
    w_it = x_it
    out_it = jnp.dtype(out_dtype).itemsize

    vmem_limit = _vmem_limit_bytes()
    budget = max(16 * 1024 * 1024, vmem_limit - 4 * 1024 * 1024)
    tile_m, tile_n, tile_k = _select_tiles(
        M, d_model, d_out, x_it, w_it, out_it, budget,
        tile_m=tile_m, tile_n=tile_n, tile_k=tile_k)

    assert tile_m % 8 == 0, "tile_m must be sublane (8) aligned"
    assert tile_n % 128 == 0 or tile_n == d_out, \
        "tile_n must be lane (128) aligned or the full d_out"
    assert d_model % tile_k == 0 and (tile_k % 128 == 0 or tile_k == d_model), \
        "tile_k must be a lane-aligned divisor of d_model (or d_model itself)"

    grid_m = pl.cdiv(M, tile_m)
    grid_n = pl.cdiv(d_out, tile_n)
    grid_k = d_model // tile_k

    fp = _footprint_bytes(tile_m, tile_n, tile_k, d_out, x_it, w_it, out_it)
    vmem_limit = int(max(vmem_limit, fp + 4 * 1024 * 1024))

    cost = pl.CostEstimate(
        flops=2 * M * d_model * d_out,
        bytes_accessed=(M * d_model * x_it + d_model * d_out * w_it
                        + d_out * 4 + M * d_out * out_it),
        transcendentals=0,
    )
    out_shape = jax.ShapeDtypeStruct((M, d_out), out_dtype)

    if grid_k > 1:
        # K-tiled path (very large d_model): keeps MXU-sized M/N tiles within
        # the VMEM budget; reduction axis last + "arbitrary", f32 accumulator.
        grid_spec = pltpu.PrefetchScalarGridSpec(
            num_scalar_prefetch=0,
            grid=(grid_m, grid_n, grid_k),
            in_specs=[
                pl.BlockSpec((tile_m, tile_k), lambda i, j, k: (i, k)),
                pl.BlockSpec((tile_k, tile_n), lambda i, j, k: (k, j)),
                pl.BlockSpec((1, tile_n), lambda i, j, k: (0, j)),
            ],
            out_specs=pl.BlockSpec((tile_m, tile_n), lambda i, j, k: (i, j)),
            scratch_shapes=[pltpu.VMEM((tile_m, tile_n), jnp.float32)],
        )
        dims = ("parallel", "parallel", "arbitrary")
        kernel = _value_kernel_ktiled
    else:
        # Grid order: keep resident (copy-elided across inner steps) the
        # operand whose re-streaming would cost the most HBM traffic.
        w_stream = grid_m * d_model * d_out * w_it   # W re-read per M row-tile
        x_stream = grid_n * M * d_model * x_it       # x re-read per N col-tile
        if w_stream <= x_stream:
            grid = (grid_m, grid_n)
            x_idx = lambda i, j: (i, 0)
            w_idx = lambda i, j: (0, j)
            b_idx = lambda i, j: (0, j)
            o_idx = lambda i, j: (i, j)
        else:
            grid = (grid_n, grid_m)
            x_idx = lambda j, i: (i, 0)
            w_idx = lambda j, i: (0, j)
            b_idx = lambda j, i: (0, j)
            o_idx = lambda j, i: (i, j)
        grid_spec = pltpu.PrefetchScalarGridSpec(
            num_scalar_prefetch=0,
            grid=grid,
            in_specs=[
                pl.BlockSpec((tile_m, d_model), x_idx),
                pl.BlockSpec((d_model, tile_n), w_idx),
                pl.BlockSpec((1, tile_n), b_idx),
            ],
            out_specs=pl.BlockSpec((tile_m, tile_n), o_idx),
        )
        # TODO(synk): on v7x, verify in a profile that ("parallel","parallel")
        # shards the grid across both TensorCores; if not, mark the M axis
        # pltpu.CORE_PARALLEL.
        dims = ("parallel", "parallel")
        kernel = _value_kernel

    out2d = pl.pallas_call(
        kernel,
        out_shape=out_shape,
        grid_spec=grid_spec,
        compiler_params=pltpu.CompilerParams(
            dimension_semantics=dims,
            vmem_limit_bytes=vmem_limit,
        ),
        cost_estimate=cost,
    )(x2d, w2d, b2d)

    return out2d.reshape(B, S, d_out)


def init_value_layer_params(key, d_model, n_heads, dtype=jnp.float32):
    """nn.Linear default init (uniform +-1/sqrt(fan_in)); W stored [d_in, d_out]."""
    d_out = d_model * n_heads
    k_w, k_b = jax.random.split(key)
    bound = 1.0 / math.sqrt(d_model)
    w = jax.random.uniform(k_w, (d_model, d_out), dtype, -bound, bound)
    b = jax.random.uniform(k_b, (d_out,), dtype, -bound, bound)
    return w, b


# ---------------------------------------------------------------------------
# Self-test
# ---------------------------------------------------------------------------

if __name__ == "__main__":
    def reference(x, w, b, dtype=None):
        xr = x if dtype is None else x.astype(dtype)
        wr = w if dtype is None else w.astype(dtype)
        y = jax.lax.dot_general(
            xr.reshape(-1, xr.shape[-1]), wr,
            dimension_numbers=(((1,), (0,)), ((), ())),
            preferred_element_type=jnp.float32,
            precision=jax.lax.Precision.HIGHEST)
        y = y + b.astype(jnp.float32)
        return y.astype(x.dtype).reshape(*x.shape[:-1], w.shape[1])

    key = jax.random.PRNGKey(0)
    kx1, kp1, kx2, kp2, kx3, kp3, kx4, kp4 = jax.random.split(key, 8)

    # 1) Module-spec config (d_out = d_model * n_heads), default bf16 MXU path.
    B, S, d_model, n_heads = 2, 8, 32, 4
    x = jax.random.normal(kx1, (B, S, d_model), jnp.float32)
    w, b = init_value_layer_params(kp1, d_model, n_heads)
    out = jax.block_until_ready(value_layer(x, w, b))
    assert out.shape == (B, S, d_model * n_heads)
    ref_bf16 = reference(x, w, b, jnp.bfloat16)
    ref_f32 = reference(x, w, b)
    assert jnp.allclose(out, ref_bf16, atol=2e-3, rtol=2e-3)
    assert jnp.allclose(out, ref_f32, atol=3e-2, rtol=3e-2)

    # 2) Strict f32 compute path (matches the PyTorch f32 module semantics).
    out32 = jax.block_until_ready(value_layer(x, w, b, compute_dtype=jnp.float32))
    assert jnp.allclose(out32, ref_f32, atol=1e-3, rtol=1e-3)

    # 3) Multi-step grid on both M and N (tiled / pipelined path).
    B, S, d_model, n_heads = 2, 64, 128, 4          # M=128, d_out=512
    x = jax.random.normal(kx2, (B, S, d_model), jnp.float32)
    w, b = init_value_layer_params(kp2, d_model, n_heads)
    out = jax.block_until_ready(value_layer(x, w, b, tile_m=64, tile_n=128))
    assert jnp.allclose(out, reference(x, w, b, jnp.bfloat16), atol=2e-3, rtol=2e-3)

    # 4) Ragged M (B*S not a tile multiple) -> edge-block clipping, no padding.
    B, S, d_model, n_heads = 3, 7, 32, 8            # M=21, d_out=256
    x = jax.random.normal(kx3, (B, S, d_model), jnp.float32)
    w, b = init_value_layer_params(kp3, d_model, n_heads)
    out = jax.block_until_ready(value_layer(x, w, b, tile_m=8, tile_n=128))
    assert jnp.allclose(out, reference(x, w, b, jnp.bfloat16), atol=2e-3, rtol=2e-3)

    # 5) K-tiled accumulator path (forced tile_k to exercise it).
    B, S, d_model, n_heads = 2, 16, 256, 1          # M=32, d_out=256
    x = jax.random.normal(kx4, (B, S, d_model), jnp.float32)
    w, b = init_value_layer_params(kp4, d_model, n_heads)
    out = jax.block_until_ready(
        value_layer(x, w, b, tile_m=32, tile_n=128, tile_k=128))
    assert jnp.allclose(out, reference(x, w, b, jnp.bfloat16), atol=2e-3, rtol=2e-3)

    print("KERNEL_OK")
</pallas_src>

<mosaic_0001>
module attributes {stable_mosaic.version = 11 : i64} {
  func.func @_value_kernel(%arg0: i32, %arg1: i32, %arg2: memref<16x32xbf16, #tpu.memory_space<vmem>>, %arg3: memref<32x128xbf16, #tpu.memory_space<vmem>>, %arg4: memref<1x128xf32, #tpu.memory_space<vmem>>, %arg5: memref<16x128xf32, #tpu.memory_space<vmem>>) attributes {dimension_semantics = [#tpu.dimension_semantics<parallel>, #tpu.dimension_semantics<parallel>], iteration_bounds = array<i64: 1, 1>, scalar_prefetch = 0 : i64, scratch_operands = 0 : i64, tpu.core_type = #tpu.core_type<tc>, window_params = [{transform_indices = @transform_0, window_bounds = array<i64: 16, 32>}, {transform_indices = @transform_1, window_bounds = array<i64: 32, 128>}, {transform_indices = @transform_2, window_bounds = array<i64: 1, 128>}, {transform_indices = @transform_3, window_bounds = array<i64: 16, 128>}]} {
    %c0 = arith.constant 0 : index
    %c0_0 = arith.constant 0 : index
    %0 = vector.load %arg2[%c0, %c0_0] : memref<16x32xbf16, #tpu.memory_space<vmem>>, vector<16x32xbf16>
    %c0_1 = arith.constant 0 : index
    %c0_2 = arith.constant 0 : index
    %1 = vector.load %arg3[%c0_1, %c0_2] : memref<32x128xbf16, #tpu.memory_space<vmem>>, vector<32x128xbf16>
    %cst = arith.constant dense<0.000000e+00> : vector<16x128xf32>
    %2 = tpu.matmul %0, %1, %cst {dimension_numbers = #tpu.dot_dimension_numbers<[1], [0], [0], [1], [0, 0, 1, 1], [], []>} : vector<16x32xbf16>, vector<32x128xbf16>, vector<16x128xf32> -> vector<16x128xf32>
    %c0_3 = arith.constant 0 : index
    %c0_4 = arith.constant 0 : index
    %3 = vector.load %arg4[%c0_3, %c0_4] : memref<1x128xf32, #tpu.memory_space<vmem>>, vector<1x128xf32>
    %4 = vector.broadcast %3 : vector<1x128xf32> to vector<16x128xf32>
    %5 = arith.addf %2, %4 : vector<16x128xf32>
    %c0_5 = arith.constant 0 : index
    %c0_6 = arith.constant 0 : index
    %6 = vector.load %arg5[%c0_5, %c0_6] : memref<16x128xf32, #tpu.memory_space<vmem>>, vector<16x128xf32>
    tpu.vector_store %arg5[%c0_5, %c0_6], %5 {strides = array<i32>} : memref<16x128xf32, #tpu.memory_space<vmem>>, vector<16x128xf32>,
    return
  }
  func.func @transform_0(%arg0: i32, %arg1: i32) -> (i32, i32) {
    %c0_i32 = arith.constant 0 : i32
    %c0_i32_0 = arith.constant 0 : i32
    return %arg1, %c0_i32 : i32, i32
  }
  func.func @transform_1(%arg0: i32, %arg1: i32) -> (i32, i32) {
    %c0_i32 = arith.constant 0 : i32
    %c0_i32_0 = arith.constant 0 : i32
    return %c0_i32, %arg0 : i32, i32
  }
  func.func @transform_2(%arg0: i32, %arg1: i32) -> (i32, i32) {
    %c0_i32 = arith.constant 0 : i32
    %c0_i32_0 = arith.constant 0 : i32
    return %c0_i32, %arg0 : i32, i32
  }
  func.func @transform_3(%arg0: i32, %arg1: i32) -> (i32, i32) {
    %c0_i32 = arith.constant 0 : i32
    return %arg1, %arg0 : i32, i32
  }
}

</mosaic_0001>

<llo_original>
// kernel: tpu_custom_call.1
$region0: #{tpu_custom_call.1}
  #allocation0 [shape = 'u32[]', space=smem, size = 0x4, offset = 0x4, fixed_abs, tag = 'smem constant byte address 0x4 - core index']
  #allocation1 [shape = 'u32[72,128]{1,0:T(1,128)}', space=vmem, size = 0x9000, scoped, tag = 'internal scratch']
  %s0 = inlined_call_operand.hbm [shape: bf16[16,32], index: 0, kind: input, shape index: {}]
  %s1 = inlined_call_operand.hbm [shape: bf16[32,128], index: 1, kind: input, shape index: {}]
  %s2 = inlined_call_operand.vmem [shape: f32[1,128], index: 2, kind: input, shape index: {}]
  %s3 = inlined_call_operand.hbm [shape: f32[16,128], index: 3, kind: output, shape index: {}]
  %s4 = sld [smem:[#allocation0]]
  $region30: #{tpu_custom_call.1} parent=0
    _
  %s6 = ssub.s32 1, %s4
  %s7 = scalar_select 0, %s6, %s4
  $region1: #{tpu_custom_call.1} parent=0
    #allocation2 [shape = 'u8[4096]{0}', space=vmem, size = 0x1000, scoped, tag = 'input window, operand 0, single buffered']
    #allocation3 [shape = 's32[1]{0}', space=sflag, size = 0x4, scoped, tag = 'scoped memory for tpu_custom_call.1']
    #allocation4 [shape = 's32[1]{0}', space=sflag, size = 0x4, scoped, tag = 'scoped memory for tpu_custom_call.1']
    #allocation5 [shape = 'u8[8192]{0}', space=vmem, size = 0x2000, scoped, tag = 'input window, operand 1, single buffered']
    #allocation6 [shape = 's32[1]{0}', space=sflag, size = 0x4, scoped, tag = 'scoped memory for tpu_custom_call.1']
    #allocation7 [shape = 'u8[8192]{0}', space=vmem, size = 0x2000, scoped, tag = 'output window, operand 0, single buffered']
    %8 = vsyncpa [#allocation3], 0
    %9 = vsyncpa [#allocation6], 0
    %10 = vsyncpa [#allocation4], 0
    // Predicated region
    $region2: #{tpu_custom_call.1} parent=1 // pred_check
      _
    $region3: #{tpu_custom_call.1} parent=1 // pred_check_branch
      %12 = sbr.rel (0) target = $region5
    $region4: #{tpu_custom_call.1} parent=1 // pred_region
      %14 = vsyncadd [#allocation3], 0
      %s15 = sshll.u32 %s0, 4
      %s16 = int_to_ptr.hbm [resolvable:$true] %s15
      %s17 = sshll.u32 [#allocation2], 4
      %s18 = int_to_ptr.vmem [resolvable:$true] %s17
      %23 = dma.hbm_to_vmem [thread:$0]  %s16, 128, %s18, [#allocation3], 64, 64, 4
    $region5: #{tpu_custom_call.1} parent=1 // pred_fallthru
      _
    // Predicated region
    $region6: #{tpu_custom_call.1} parent=1 // pred_check
      _
    $region7: #{tpu_custom_call.1} parent=1 // pred_check_branch
      %25 = sbr.rel (0) target = $region9
    $region8: #{tpu_custom_call.1} parent=1 // pred_region
      %27 = vsyncadd [#allocation6], 0
      %s28 = sshll.u32 %s1, 4
      %s29 = int_to_ptr.hbm [resolvable:$true] %s28
      %s30 = sshll.u32 [#allocation5], 4
      %s31 = int_to_ptr.vmem [resolvable:$true] %s30
      %36 = dma.hbm_to_vmem [thread:$0]  %s29, 256, %s31, [#allocation6], 64, 64, 4
    $region9: #{tpu_custom_call.1} parent=1 // pred_fallthru
      _
    // Predicated region
    $region10: #{tpu_custom_call.1} parent=1 // pred_check
      _
    $region11: #{tpu_custom_call.1} parent=1 // pred_check_branch
      %38 = sbr.rel (0) target = $region13
    $region12: #{tpu_custom_call.1} parent=1 // pred_region
      _
    $region13: #{tpu_custom_call.1} parent=1 // pred_fallthru
      _
    // Predicated region
    $region14: #{tpu_custom_call.1} parent=1 // pred_check
      _
    $region15: #{tpu_custom_call.1} parent=1 // pred_check_branch
      %40 = sbr.rel (0) target = $region17
    $region16: #{tpu_custom_call.1} parent=1 // pred_region
      %42 = dma.done [#allocation3], 128
    $region17: #{tpu_custom_call.1} parent=1 // pred_fallthru
      _
    // Predicated region
    $region18: #{tpu_custom_call.1} parent=1 // pred_check
      _
    $region19: #{tpu_custom_call.1} parent=1 // pred_check_branch
      %44 = sbr.rel (0) target = $region21
    $region20: #{tpu_custom_call.1} parent=1 // pred_region
      %46 = dma.done [#allocation6], 256
    $region21: #{tpu_custom_call.1} parent=1 // pred_fallthru
      _
    %v48 = vld [vmem:[#allocation2] sm:$0xf]
    %v49 = vld [vmem:[#allocation2 + $0x4] sm:$0xf]
    %v50 = vld [vmem:[#allocation5] sm:$0xf]
    %v51 = vld [vmem:[#allocation5 + $0x4] sm:$0xf]
    %v52 = vld [vmem:[#allocation5 + $0x8] sm:$0xf]
    %v53 = vld [vmem:[#allocation5 + $0xc] sm:$0xf]
    %v54 = vld [vmem:[%s2] sm:$0x1]
    %v56 = vperm.slane %v54, 0
    %v60 = vunpack.c.l.b16 %v48
    %v61 = vunpack.c.l.b16 %v49
    %v62 = vpack.c.b16 %v61, %v60
    %v67 = vunpack.c.l.b16 %v50
    %v68 = vunpack.c.l.b16 %v51
    %v69 = vunpack.c.l.b16 %v52
    %v70 = vunpack.c.l.b16 %v53
    %v71 = vpack.c.b16 %v68, %v67
    %v72 = vpack.c.b16 %v70, %v69
    %vm75 = vcmask 261120
    %v77 = vsel %vm75, %v62, 0
    %79 = vmatpush.bf16.msra.mxu0 0
    %80 = vmatpush.bf16.msra.mxu0 0
    %81 = vmatpush.bf16.msra.mxu0 0
    %82 = vmatpush.bf16.msra.mxu0 0
    %83 = vmatpush.bf16.msra.mxu0 0
    %84 = vmatpush.bf16.msra.mxu0 0
    %85 = vmatpush.bf16.msra.mxu0 %v72
    %86 = vmatpush.bf16.msra.mxu0 %v71
    %87 = vmatmul.bf16.gmra.mxu0 %v77
    %v88 = vpop.f32.mrf.mxu0
    %v89 = vadd.f32 %v56, %v88
    %v90 = vpop.f32.mrf.mxu0
    %v91 = vadd.f32 %v56, %v90
    %92 = vdwg.mxu0
    %93 = vst [vmem:[#allocation7] sm:$0xff] %v89
    %94 = vst [vmem:[#allocation7 + $0x8] sm:$0xff] %v91
    // Predicated region
    $region22: #{tpu_custom_call.1} parent=1 // pred_check
      _
    $region23: #{tpu_custom_call.1} parent=1 // pred_check_branch
      %96 = sbr.rel (0) target = $region25
    $region24: #{tpu_custom_call.1} parent=1 // pred_region
      %98 = vsyncadd [#allocation4], 0
      %s99 = sshll.u32 [#allocation7], 4
      %s100 = int_to_ptr.vmem [resolvable:$true] %s99
      %s101 = sshll.u32 %s3, 4
      %s102 = int_to_ptr.hbm [resolvable:$true] %s101
      %107 = dma.vmem_to_hbm [thread:$0]  %s100, 256, %s102, [#allocation4], 128, 128, 8
    $region25: #{tpu_custom_call.1} parent=1 // pred_fallthru
      _
    // Predicated region
    $region26: #{tpu_custom_call.1} parent=1 // pred_check
      _
    $region27: #{tpu_custom_call.1} parent=1 // pred_check_branch
      %109 = sbr.rel (0) target = $region29
    $region28: #{tpu_custom_call.1} parent=1 // pred_region
      %111 = dma.done [#allocation4], 256
    $region29: #{tpu_custom_call.1} parent=1 // pred_fallthru
      _
    %112 = vsyncpa [#allocation3], 1
    %113 = vsyncpa [#allocation6], 1
    %114 = vsyncpa [#allocation4], 1

</llo_original>
